<compile_context>
chip_gen: v5e
topology: v5e:2x2
jax: 0.10.0
libtpu: 0.0.40
codegen_flags: <defaults>
</compile_context>

<pallas_src>
import jax
import jax.numpy as jnp
from jax import lax
from jax.experimental import pallas as pl
from jax.experimental.pallas import tpu as pltpu


def spam_classifier_kernel(ids_ref,   # VMEM (TB, S) int32   batch tile of token ids
                           emb_ref,   # VMEM (V, E)  f32     embedding table (resident)
                           w_ref,     # VMEM (1, E)  f32     nn.Linear.weight (resident)
                           b_ref,     # SMEM (1, 1)  f32     nn.Linear.bias
                           out_ref):  # VMEM (1, TB) f32     lane-dense logits block
    tb, seq = ids_ref.shape
    vocab = emb_ref.shape[0]

    # ---- token counts per batch row: counts[b, v] = #{s : ids[b, s] == v} -------------------
    lane_v = lax.broadcasted_iota(jnp.int32, (tb, vocab), 1)            # (TB, V)
    counts = jnp.zeros((tb, vocab), jnp.float32)
    for s in range(seq):                                                # static, fully unrolled
        tok = ids_ref[:, s:s + 1]                                       # (TB, 1) static ref slice
        counts = counts + (lane_v == tok).astype(jnp.float32)          # lane-broadcast compare

    # ---- embedding-bag sum as one MXU matmul: (TB, V) @ (V, E) -> (TB, E) -------------------
    emb_sum = jnp.dot(counts, emb_ref[...], preferred_element_type=jnp.float32)

    # ---- Linear(E, 1), fused: contract E of w (1, E) with E of emb_sum (TB, E) -> (1, TB) ---
    logits = lax.dot_general(w_ref[...], emb_sum,
                             dimension_numbers=(((1,), (1,)), ((), ())),
                             preferred_element_type=jnp.float32)
    out_ref[...] = logits + b_ref[0, 0]


def spam_classifier_forward(ids, emb_table, fc_weight, fc_bias, *, batch_tile=128):
    B, S = ids.shape
    V, E = emb_table.shape

    ids = ids.astype(jnp.int32)
    emb_table = emb_table.astype(jnp.float32)
    fc_weight = jnp.asarray(fc_weight, jnp.float32).reshape(1, E)
    fc_bias = jnp.asarray(fc_bias, jnp.float32).reshape(1, 1)

    # Batch tile: whole batch in one step when small; otherwise 128 rows per step so the
    # (1, TB) lane-dense output block stays 128-aligned.
    TB = B if B <= batch_tile else batch_tile
    Bp = pl.cdiv(B, TB) * TB
    if Bp != B:
        ids = jnp.pad(ids, ((0, Bp - B), (0, 0)))      # padded rows are sliced off below

    # Explicit scoped-VMEM budget: resident table (+ small blocks), with headroom.
    table_bytes = V * E * 4
    vmem_limit = min(64 * 2**20, max(32 * 2**20, 2 * table_bytes + (8 * 2**20)))

    out = pl.pallas_call(
        spam_classifier_kernel,
        out_shape=jax.ShapeDtypeStruct((1, Bp), jnp.float32),
        grid_spec=pltpu.PrefetchScalarGridSpec(
            num_scalar_prefetch=0,
            grid=(Bp // TB,),
            in_specs=[
                pl.BlockSpec((TB, S), lambda i: (i, 0)),              # ids batch tile
                pl.BlockSpec((V, E), lambda i: (0, 0)),               # resident embedding table
                pl.BlockSpec((1, E), lambda i: (0, 0)),               # resident fc weight
                pl.BlockSpec(memory_space=pltpu.MemorySpace.SMEM),    # fc bias scalar
            ],
            out_specs=pl.BlockSpec((1, TB), lambda i: (0, i)),        # dense per-tile block
        ),
        compiler_params=pltpu.CompilerParams(
            dimension_semantics=("parallel",),   # distinct output block per step -> megacore OK
            vmem_limit_bytes=vmem_limit,
        ),
    )(ids, emb_table, fc_weight, fc_bias)

    return out[0, :B].reshape(B, 1)


if __name__ == "__main__":
    # Small, deterministic setup consistent with the module's forward:
    #   vocab_size=128, embedding_dim=32, batch=2, seq=8
    vocab_size, embedding_dim = 128, 32
    batch, seq = 2, 8

    key = jax.random.PRNGKey(0)
    k_ids, k_emb, k_w, k_b = jax.random.split(key, 4)

    ids = jax.random.randint(k_ids, (batch, seq), 0, vocab_size, dtype=jnp.int32)
    emb_table = jax.random.normal(k_emb, (vocab_size, embedding_dim), dtype=jnp.float32)
    fc_weight = jax.random.normal(k_w, (1, embedding_dim), dtype=jnp.float32) * 0.1
    fc_bias = jax.random.normal(k_b, (1,), dtype=jnp.float32) * 0.1

    out = spam_classifier_forward(ids, emb_table, fc_weight, fc_bias)
    out = jax.block_until_ready(out)

    # Pure-JAX reference: embedding(x).sum(1) @ W^T + b
    ref = jnp.take(emb_table, ids, axis=0).sum(axis=1) @ fc_weight.T + fc_bias[None, :]
    assert out.shape == (batch, 1)
    assert jnp.allclose(out, ref, atol=1e-4, rtol=1e-4), (out, ref)

    print("KERNEL_OK")
</pallas_src>

<mosaic_0001>
module attributes {stable_mosaic.version = 11 : i64} {
  func.func @spam_classifier_kernel(%arg0: i32, %arg1: memref<2x8xi32, #tpu.memory_space<vmem>>, %arg2: memref<128x32xf32, #tpu.memory_space<vmem>>, %arg3: memref<1x32xf32, #tpu.memory_space<vmem>>, %arg4: memref<1x1xf32, #tpu.memory_space<smem>>, %arg5: memref<1x2xf32, #tpu.memory_space<vmem>>) attributes {dimension_semantics = [#tpu.dimension_semantics<parallel>], iteration_bounds = array<i64: 1>, scalar_prefetch = 0 : i64, scratch_operands = 0 : i64, tpu.core_type = #tpu.core_type<tc>, window_params = [{transform_indices = @transform_0, window_bounds = array<i64: 2, 8>}, {pipeline_mode = #tpu.pipeline_mode<synchronous>, transform_indices = @transform_1, window_bounds = array<i64: 128, 32>}, {pipeline_mode = #tpu.pipeline_mode<synchronous>, transform_indices = @transform_2, window_bounds = array<i64: 1, 32>}, {transform_indices = @transform_3, window_bounds = array<i64: 1, 1>}, {transform_indices = @transform_4, window_bounds = array<i64: 1, 2>}]} {
    %0 = tpu.iota {dimensions = array<i32: 1>} : vector<2x128xi32>
    %cst = arith.constant 0.000000e+00 : f32
    %1 = vector.broadcast %cst : f32 to vector<2x128xf32>
    %c0 = arith.constant 0 : index
    %c0_0 = arith.constant 0 : index
    %2 = vector.load %arg1[%c0, %c0_0] : memref<2x8xi32, #tpu.memory_space<vmem>>, vector<2x1xi32>
    %3 = vector.broadcast %2 : vector<2x1xi32> to vector<2x128xi32>
    %4 = arith.cmpi eq, %0, %3 : vector<2x128xi32>
    %5 = arith.extui %4 : vector<2x128xi1> to vector<2x128xi32>
    %6 = arith.sitofp %5 : vector<2x128xi32> to vector<2x128xf32>
    %7 = arith.addf %1, %6 : vector<2x128xf32>
    %c0_1 = arith.constant 0 : index
    %c1 = arith.constant 1 : index
    %8 = vector.load %arg1[%c0_1, %c1] : memref<2x8xi32, #tpu.memory_space<vmem>>, vector<2x1xi32>
    %9 = vector.broadcast %8 : vector<2x1xi32> to vector<2x128xi32>
    %10 = arith.cmpi eq, %0, %9 : vector<2x128xi32>
    %11 = arith.extui %10 : vector<2x128xi1> to vector<2x128xi32>
    %12 = arith.sitofp %11 : vector<2x128xi32> to vector<2x128xf32>
    %13 = arith.addf %7, %12 : vector<2x128xf32>
    %c0_2 = arith.constant 0 : index
    %c2 = arith.constant 2 : index
    %14 = vector.load %arg1[%c0_2, %c2] : memref<2x8xi32, #tpu.memory_space<vmem>>, vector<2x1xi32>
    %15 = vector.broadcast %14 : vector<2x1xi32> to vector<2x128xi32>
    %16 = arith.cmpi eq, %0, %15 : vector<2x128xi32>
    %17 = arith.extui %16 : vector<2x128xi1> to vector<2x128xi32>
    %18 = arith.sitofp %17 : vector<2x128xi32> to vector<2x128xf32>
    %19 = arith.addf %13, %18 : vector<2x128xf32>
    %c0_3 = arith.constant 0 : index
    %c3 = arith.constant 3 : index
    %20 = vector.load %arg1[%c0_3, %c3] : memref<2x8xi32, #tpu.memory_space<vmem>>, vector<2x1xi32>
    %21 = vector.broadcast %20 : vector<2x1xi32> to vector<2x128xi32>
    %22 = arith.cmpi eq, %0, %21 : vector<2x128xi32>
    %23 = arith.extui %22 : vector<2x128xi1> to vector<2x128xi32>
    %24 = arith.sitofp %23 : vector<2x128xi32> to vector<2x128xf32>
    %25 = arith.addf %19, %24 : vector<2x128xf32>
    %c0_4 = arith.constant 0 : index
    %c4 = arith.constant 4 : index
    %26 = vector.load %arg1[%c0_4, %c4] : memref<2x8xi32, #tpu.memory_space<vmem>>, vector<2x1xi32>
    %27 = vector.broadcast %26 : vector<2x1xi32> to vector<2x128xi32>
    %28 = arith.cmpi eq, %0, %27 : vector<2x128xi32>
    %29 = arith.extui %28 : vector<2x128xi1> to vector<2x128xi32>
    %30 = arith.sitofp %29 : vector<2x128xi32> to vector<2x128xf32>
    %31 = arith.addf %25, %30 : vector<2x128xf32>
    %c0_5 = arith.constant 0 : index
    %c5 = arith.constant 5 : index
    %32 = vector.load %arg1[%c0_5, %c5] : memref<2x8xi32, #tpu.memory_space<vmem>>, vector<2x1xi32>
    %33 = vector.broadcast %32 : vector<2x1xi32> to vector<2x128xi32>
    %34 = arith.cmpi eq, %0, %33 : vector<2x128xi32>
    %35 = arith.extui %34 : vector<2x128xi1> to vector<2x128xi32>
    %36 = arith.sitofp %35 : vector<2x128xi32> to vector<2x128xf32>
    %37 = arith.addf %31, %36 : vector<2x128xf32>
    %c0_6 = arith.constant 0 : index
    %c6 = arith.constant 6 : index
    %38 = vector.load %arg1[%c0_6, %c6] : memref<2x8xi32, #tpu.memory_space<vmem>>, vector<2x1xi32>
    %39 = vector.broadcast %38 : vector<2x1xi32> to vector<2x128xi32>
    %40 = arith.cmpi eq, %0, %39 : vector<2x128xi32>
    %41 = arith.extui %40 : vector<2x128xi1> to vector<2x128xi32>
    %42 = arith.sitofp %41 : vector<2x128xi32> to vector<2x128xf32>
    %43 = arith.addf %37, %42 : vector<2x128xf32>
    %c0_7 = arith.constant 0 : index
    %c7 = arith.constant 7 : index
    %44 = vector.load %arg1[%c0_7, %c7] : memref<2x8xi32, #tpu.memory_space<vmem>>, vector<2x1xi32>
    %45 = vector.broadcast %44 : vector<2x1xi32> to vector<2x128xi32>
    %46 = arith.cmpi eq, %0, %45 : vector<2x128xi32>
    %47 = arith.extui %46 : vector<2x128xi1> to vector<2x128xi32>
    %48 = arith.sitofp %47 : vector<2x128xi32> to vector<2x128xf32>
    %49 = arith.addf %43, %48 : vector<2x128xf32>
    %c0_8 = arith.constant 0 : index
    %c0_9 = arith.constant 0 : index
    %50 = vector.load %arg2[%c0_8, %c0_9] : memref<128x32xf32, #tpu.memory_space<vmem>>, vector<128x32xf32>
    %cst_10 = arith.constant dense<0.000000e+00> : vector<2x32xf32>
    %51 = tpu.matmul %49, %50, %cst_10 {dimension_numbers = #tpu.dot_dimension_numbers<[1], [0], [0], [1], [0, 0, 1, 1], [], []>} : vector<2x128xf32>, vector<128x32xf32>, vector<2x32xf32> -> vector<2x32xf32>
    %c0_11 = arith.constant 0 : index
    %c0_12 = arith.constant 0 : index
    %52 = vector.load %arg3[%c0_11, %c0_12] : memref<1x32xf32, #tpu.memory_space<vmem>>, vector<1x32xf32>
    %cst_13 = arith.constant dense<0.000000e+00> : vector<1x2xf32>
    %53 = tpu.matmul %52, %51, %cst_13 {dimension_numbers = #tpu.dot_dimension_numbers<[1], [1], [0], [0], [0, 0, 1, 0], [], []>} : vector<1x32xf32>, vector<2x32xf32>, vector<1x2xf32> -> vector<1x2xf32>
    %c0_14 = arith.constant 0 : index
    %c0_15 = arith.constant 0 : index
    %54 = memref.load %arg4[%c0_14, %c0_15] : memref<1x1xf32, #tpu.memory_space<smem>>
    %55 = vector.broadcast %54 : f32 to vector<1x2xf32>
    %56 = arith.addf %53, %55 : vector<1x2xf32>
    %c0_16 = arith.constant 0 : index
    %c0_17 = arith.constant 0 : index
    %57 = vector.load %arg5[%c0_16, %c0_17] : memref<1x2xf32, #tpu.memory_space<vmem>>, vector<1x2xf32>
    tpu.vector_store %arg5[%c0_16, %c0_17], %56 {strides = array<i32>} : memref<1x2xf32, #tpu.memory_space<vmem>>, vector<1x2xf32>,
    return
  }
  func.func @transform_0(%arg0: i32) -> (i32, i32) {
    %c0_i32 = arith.constant 0 : i32
    %c0_i32_0 = arith.constant 0 : i32
    return %arg0, %c0_i32 : i32, i32
  }
  func.func @transform_1(%arg0: i32) -> (i32, i32) {
    %c0_i32 = arith.constant 0 : i32
    %c0_i32_0 = arith.constant 0 : i32
    %c0_i32_1 = arith.constant 0 : i32
    return %c0_i32, %c0_i32_0 : i32, i32
  }
  func.func @transform_2(%arg0: i32) -> (i32, i32) {
    %c0_i32 = arith.constant 0 : i32
    %c0_i32_0 = arith.constant 0 : i32
    %c0_i32_1 = arith.constant 0 : i32
    return %c0_i32, %c0_i32_0 : i32, i32
  }
  func.func @transform_3(%arg0: i32) -> (i32, i32) {
    %c0_i32 = arith.constant 0 : i32
    %c0_i32_0 = arith.constant 0 : i32
    %c0_i32_1 = arith.constant 0 : i32
    return %c0_i32, %c0_i32_0 : i32, i32
  }
  func.func @transform_4(%arg0: i32) -> (i32, i32) {
    %c0_i32 = arith.constant 0 : i32
    %c0_i32_0 = arith.constant 0 : i32
    return %c0_i32, %arg0 : i32, i32
  }
}

</mosaic_0001>

<llo_original>
// kernel: tpu_custom_call.1
$region0: #{tpu_custom_call.1}
  #allocation0 [shape = 'u32[]', space=smem, size = 0x4, offset = 0x4, fixed_abs, tag = 'smem constant byte address 0x4 - core index']
  #allocation1 [shape = 'u32[72,128]{1,0:T(1,128)}', space=vmem, size = 0x9000, scoped, tag = 'internal scratch']
  #allocation2 [shape = 'f32[1,1]{1,0:T(1,128)S(6)}', space=smem, size = 0x200, scoped, tag = 'scoped memory for tpu_custom_call.1']
  %s0 = inlined_call_operand.vmem [shape: s32[2,8], index: 0, kind: input, shape index: {}]
  %s1 = inlined_call_operand.vmem [shape: f32[128,32], index: 1, kind: input, shape index: {}]
  %s2 = inlined_call_operand.vmem [shape: f32[1,32], index: 2, kind: input, shape index: {}]
  %s3 = inlined_call_operand.<no memory space> [shape: f32[1,1], index: 3, kind: input, shape index: {}]
  %s4 = inlined_call_operand.hbm [shape: f32[1,2], index: 4, kind: output, shape index: {}]
  %s5 = sld [smem:[#allocation0]]
  $region26: #{tpu_custom_call.1} parent=0
    _
  %s7 = ssub.s32 1, %s5
  %s8 = scalar_select 0, %s7, %s5
  %9 = sst [smem:[#allocation2]] %s3
  $region1: #{tpu_custom_call.1} parent=0
    #allocation3 [shape = 'u8[512]{0}', space=vmem, size = 0x400, scoped, tag = 'output window, operand 0, single buffered']
    #allocation4 [shape = 's32[1]{0}', space=sflag, size = 0x4, scoped, tag = 'scoped memory for tpu_custom_call.1']
    %10 = vsyncpa [#allocation4], 0
    // Predicated region
    $region2: #{tpu_custom_call.1} parent=1 // pred_check
      _
    $region3: #{tpu_custom_call.1} parent=1 // pred_check_branch
      %12 = sbr.rel (0) target = $region5
    $region4: #{tpu_custom_call.1} parent=1 // pred_region
      _
    $region5: #{tpu_custom_call.1} parent=1 // pred_fallthru
      _
    // Predicated region
    $region6: #{tpu_custom_call.1} parent=1 // pred_check
      _
    $region7: #{tpu_custom_call.1} parent=1 // pred_check_branch
      %14 = sbr.rel (0) target = $region9
    $region8: #{tpu_custom_call.1} parent=1 // pred_region
      _
    $region9: #{tpu_custom_call.1} parent=1 // pred_fallthru
      _
    // Predicated region
    $region10: #{tpu_custom_call.1} parent=1 // pred_check
      _
    $region11: #{tpu_custom_call.1} parent=1 // pred_check_branch
      %16 = sbr.rel (0) target = $region13
    $region12: #{tpu_custom_call.1} parent=1 // pred_region
      _
    $region13: #{tpu_custom_call.1} parent=1 // pred_fallthru
      _
    // Predicated region
    $region14: #{tpu_custom_call.1} parent=1 // pred_check
      _
    $region15: #{tpu_custom_call.1} parent=1 // pred_check_branch
      %18 = sbr.rel (0) target = $region17
    $region16: #{tpu_custom_call.1} parent=1 // pred_region
      _
    $region17: #{tpu_custom_call.1} parent=1 // pred_fallthru
      _
    %v19 = vlaneseq
    %v20 = vand.u32 %v19, 127
    %v21 = vld [vmem:[%s0] sm:$0x3]
    %22 = vset.pattern.permute.xlu0 0
    %23 = vperm.xlu0 %22, %v21
    %v24 = vpop.permute.xlu0 %23
    %vm25 = vcmp.eq.s32.totalorder %v20, %v24
    %v26 = vsel %vm25, 1, 0
    %v27 = vcvt.s32.f32 %v26
    %v28 = vadd.f32 %v27, 0.0
    %29 = vset.pattern.permute.xlu0 1
    %30 = vperm.xlu0 %29, %v21
    %v31 = vpop.permute.xlu0 %30
    %vm32 = vcmp.eq.s32.totalorder %v20, %v31
    %v33 = vsel %vm32, 1, 0
    %v34 = vcvt.s32.f32 %v33
    %v35 = vadd.f32 %v28, %v34
    %36 = vset.pattern.permute.xlu0 2
    %37 = vperm.xlu0 %36, %v21
    %v38 = vpop.permute.xlu0 %37
    %vm39 = vcmp.eq.s32.totalorder %v20, %v38
    %v40 = vsel %vm39, 1, 0
    %v41 = vcvt.s32.f32 %v40
    %v42 = vadd.f32 %v35, %v41
    %43 = vset.pattern.permute.xlu0 3
    %44 = vperm.xlu0 %43, %v21
    %v45 = vpop.permute.xlu0 %44
    %vm46 = vcmp.eq.s32.totalorder %v20, %v45
    %v47 = vsel %vm46, 1, 0
    %v48 = vcvt.s32.f32 %v47
    %v49 = vadd.f32 %v42, %v48
    %50 = vset.pattern.permute.xlu0 4
    %51 = vperm.xlu0 %50, %v21
    %v52 = vpop.permute.xlu0 %51
    %vm53 = vcmp.eq.s32.totalorder %v20, %v52
    %v54 = vsel %vm53, 1, 0
    %v55 = vcvt.s32.f32 %v54
    %v56 = vadd.f32 %v49, %v55
    %57 = vset.pattern.permute.xlu0 5
    %58 = vperm.xlu0 %57, %v21
    %v59 = vpop.permute.xlu0 %58
    %vm60 = vcmp.eq.s32.totalorder %v20, %v59
    %v61 = vsel %vm60, 1, 0
    %v62 = vcvt.s32.f32 %v61
    %v63 = vadd.f32 %v56, %v62
    %64 = vset.pattern.permute.xlu0 6
    %65 = vperm.xlu0 %64, %v21
    %v66 = vpop.permute.xlu0 %65
    %vm67 = vcmp.eq.s32.totalorder %v20, %v66
    %v68 = vsel %vm67, 1, 0
    %v69 = vcvt.s32.f32 %v68
    %v70 = vadd.f32 %v63, %v69
    %71 = vset.pattern.permute.xlu0 7
    %72 = vperm.xlu0 %71, %v21
    %v73 = vpop.permute.xlu0 %72
    %vm74 = vcmp.eq.s32.totalorder %v20, %v73
    %v75 = vsel %vm74, 1, 0
    %v76 = vcvt.s32.f32 %v75
    %v77 = vadd.f32 %v70, %v76
    %v78 = vld [vmem:[%s1] sm:$0xff]
    %v79 = vld [vmem:[%s1 + $0x8] sm:$0xff]
    %v80 = vld [vmem:[%s1 + $0x10] sm:$0xff]
    %v81 = vld [vmem:[%s1 + $0x18] sm:$0xff]
    %v82 = vld [vmem:[%s1 + $0x20] sm:$0xff]
    %v83 = vld [vmem:[%s1 + $0x28] sm:$0xff]
    %v84 = vld [vmem:[%s1 + $0x30] sm:$0xff]
    %v85 = vld [vmem:[%s1 + $0x38] sm:$0xff]
    %v86 = vld [vmem:[%s1 + $0x40] sm:$0xff]
    %v87 = vld [vmem:[%s1 + $0x48] sm:$0xff]
    %v88 = vld [vmem:[%s1 + $0x50] sm:$0xff]
    %v89 = vld [vmem:[%s1 + $0x58] sm:$0xff]
    %v90 = vld [vmem:[%s1 + $0x60] sm:$0xff]
    %v91 = vld [vmem:[%s1 + $0x68] sm:$0xff]
    %v92 = vld [vmem:[%s1 + $0x70] sm:$0xff]
    %v93 = vld [vmem:[%s1 + $0x78] sm:$0xff]
    %94 = vmatpush.msra.mxu0 %v93
    %95 = vmatpush.msra.mxu0 %v92
    %96 = vmatpush.msra.mxu0 %v91
    %97 = vmatpush.msra.mxu0 %v90
    %98 = vmatpush.msra.mxu0 %v89
    %99 = vmatpush.msra.mxu0 %v88
    %100 = vmatpush.msra.mxu0 %v87
    %101 = vmatpush.msra.mxu0 %v86
    %102 = vmatpush.msra.mxu0 %v85
    %103 = vmatpush.msra.mxu0 %v84
    %104 = vmatpush.msra.mxu0 %v83
    %105 = vmatpush.msra.mxu0 %v82
    %106 = vmatpush.msra.mxu0 %v81
    %107 = vmatpush.msra.mxu0 %v80
    %108 = vmatpush.msra.mxu0 %v79
    %109 = vmatpush.msra.mxu0 %v78
    %110 = vmatmul.f32.gmra.mxu0 %v77
    %v111 = vpop.f32.mrf.mxu0
    %v112 = vadd.f32 0.0, %v111
    %113 = vdwg.mxu0
    %v114 = vld [vmem:[%s2] sm:$0x1]
    %s115 = sld [smem:[#allocation2]]
    %v116 = vstv %s115
    %vm117 = vcmask 261120
    %v119 = vsel %vm117, %v114, 0
    %v122 = vsel %vm117, %v112, 0
    %124 = vmatpush.xpose.msra.mxu0 0.0
    %125 = vmatpush.xpose.msra.mxu0 0.0
    %126 = vmatpush.xpose.msra.mxu0 0.0
    %127 = vmatpush.xpose.msra.mxu0 0.0
    %128 = vmatpush.xpose.msra.mxu0 0.0
    %129 = vmatpush.xpose.msra.mxu0 0.0
    %130 = vmatpush.xpose.msra.mxu0 0.0
    %131 = vmatpush.xpose.msra.mxu0 0.0
    %132 = vmatpush.xpose.msra.mxu0 0.0
    %133 = vmatpush.xpose.msra.mxu0 0.0
    %134 = vmatpush.xpose.msra.mxu0 0.0
    %135 = vmatpush.xpose.msra.mxu0 0.0
    %136 = vmatpush.xpose.msra.mxu0 0.0
    %137 = vmatpush.xpose.msra.mxu0 0.0
    %138 = vmatpush.xpose.msra.mxu0 0.0
    %139 = vmatpush.xpose.msra.mxu0 %v122
    %140 = vmatmul.f32.gmra.mxu0 %v119
    %v141 = vpop.f32.mrf.mxu0
    %v142 = vadd.f32 %v116, %v141
    %143 = vdwg.mxu0
    %vm144 = vcmask 8192
    %145 = vst.msk [vmem:[#allocation3] sm:$0x1] %vm144, %v142
    // Predicated region
    $region18: #{tpu_custom_call.1} parent=1 // pred_check
      _
    $region19: #{tpu_custom_call.1} parent=1 // pred_check_branch
      %147 = sbr.rel (0) target = $region21
    $region20: #{tpu_custom_call.1} parent=1 // pred_region
      %149 = vsyncadd [#allocation4], 0
      %s151 = sshll.u32 [#allocation3], 4
      %s152 = int_to_ptr.vmem [resolvable:$true] %s151
      %s153 = sshll.u32 %s4, 4
      %s154 = int_to_ptr.hbm [resolvable:$true] %s153
      %156 = dma.vmem_to_hbm [thread:$0]  %s152, 16, %s154, [#allocation4]
    $region21: #{tpu_custom_call.1} parent=1 // pred_fallthru
      _
    // Predicated region
    $region22: #{tpu_custom_call.1} parent=1 // pred_check
      _
    $region23: #{tpu_custom_call.1} parent=1 // pred_check_branch
      %158 = sbr.rel (0) target = $region25
    $region24: #{tpu_custom_call.1} parent=1 // pred_region
      %160 = dma.done [#allocation4], 16
    $region25: #{tpu_custom_call.1} parent=1 // pred_fallthru
      _
    %161 = vsyncpa [#allocation4], 1

</llo_original>
